<compile_context>
chip_gen: v7x
topology: tpu7x:2x2x1
jax: 0.10.0
libtpu: 0.0.40
codegen_flags: <defaults>
</compile_context>

<pallas_src>
import jax
import jax.numpy as jnp
from jax.experimental import pallas as pl
from jax.experimental.pallas import tpu as pltpu

HIDDEN_DIM = 128                      # module default
NUM_SYM_POINTS = 10                   # nn.Embedding(10, hidden_dim)
LN_EPS = 1e-5
DEFAULT_TILE_N = 4096                 # rows-per-step cap (multiple of 256)
PACK_W = 8                            # packed input width: [kx, ky, kz, label, 0, 0, 0, 0]
VMEM_LIMIT_BYTES = 48 * 1024 * 1024   # > v5e 16 MiB scoped default, < v7x 64 MiB physical


def _round_up(x, m):
    return (x + m - 1) // m * m


def _bz_body(x_ref, w1_ref, b1_ref, gamma_ref, beta_ref, w2_ref, b2_ref,
             table_ref, out_ref, *, has_sym):
    x = x_ref[...]                                            # [T, 8] f32

    # Linear(3 -> H) on the MXU. w1 is zero-padded to (8, H), so the label
    # column (col 3) and the zero-fill columns contribute nothing.
    h = jnp.dot(x, w1_ref[...], preferred_element_type=jnp.float32) + b1_ref[...]

    # LayerNorm over the hidden (lane) dim: biased variance, eps=1e-5, f32.
    mean = jnp.mean(h, axis=-1, keepdims=True)
    c = h - mean
    var = jnp.mean(c * c, axis=-1, keepdims=True)
    scale = jax.lax.rsqrt(var + LN_EPS) * gamma_ref[...]      # [T, H], FMA-friendly affine
    hr = jnp.maximum(c * scale + beta_ref[...], 0.0)          # LN affine + ReLU

    # Linear(H -> H): bf16 MXU operands, f32 accumulation.
    y = jnp.dot(hr.astype(jnp.bfloat16), w2_ref[...],
                preferred_element_type=jnp.float32) + b2_ref[...]

    if has_sym:
        # Embedding lookup as a one-hot bf16 MXU matmul. Label column is f32
        # holding an exact small integer; padded rows carry -1 -> all-zero row.
        lbl = x[:, 3:4].astype(jnp.int32)                     # [T, 1]
        ids = jax.lax.broadcasted_iota(
            jnp.int32, (lbl.shape[0], NUM_SYM_POINTS), 1)
        onehot = (lbl == ids).astype(jnp.bfloat16)            # single cast
        y = y + jnp.dot(onehot, table_ref[...],
                        preferred_element_type=jnp.float32)

    out_ref[...] = y.astype(out_ref.dtype)


def _kernel_with_sym(x_ref, w1_ref, b1_ref, gamma_ref, beta_ref, w2_ref,
                     b2_ref, table_ref, out_ref):
    _bz_body(x_ref, w1_ref, b1_ref, gamma_ref, beta_ref, w2_ref, b2_ref,
             table_ref, out_ref, has_sym=True)


def _kernel_no_sym(x_ref, w1_ref, b1_ref, gamma_ref, beta_ref, w2_ref,
                   b2_ref, out_ref):
    _bz_body(x_ref, w1_ref, b1_ref, gamma_ref, beta_ref, w2_ref, b2_ref,
             None, out_ref, has_sym=False)


def _choose_tiling(n, tile_n):
    """Row tile: always a multiple of 8 (sublane); for large N a multiple of
    256 with at least 4 grid steps so both v7x TensorCores get work and the
    ~0.35us/step overhead amortizes."""
    n_pad = _round_up(max(n, 8), 8)
    if n_pad <= 256:
        return n_pad, n_pad, 1
    tile_cap = max(256, (int(tile_n) // 256) * 256)
    tile = min(tile_cap, _round_up(pl.cdiv(n_pad, 4), 256))
    n_pad = _round_up(n_pad, tile)
    return n_pad, tile, n_pad // tile


def brillouin_zone_encoder(k_points, symmetry_labels, params, *,
                           tile_n=DEFAULT_TILE_N, out_dtype=jnp.float32):
    """k_points: [N, 3] f32; symmetry_labels: [N] int (or None).

    out_dtype=jnp.bfloat16 halves the dominant HBM write stream (worth
    ~1.2-2x on v5e/v6e) when downstream tolerates it; default f32 matches
    the PyTorch module.
    """
    n = k_points.shape[0]
    h = HIDDEN_DIM
    has_sym = symmetry_labels is not None and symmetry_labels.size > 0

    n_pad, tile, n_steps = _choose_tiling(n, tile_n)

    # Pack [kx, ky, kz, label, 0, 0, 0, 0] into a single f32 input block.
    # Padded rows get label = -1 (never matches a symmetry id -> zero embedding).
    kp = k_points.astype(jnp.float32)
    if has_sym:
        lbl = symmetry_labels.astype(jnp.float32).reshape(n, 1)
    else:
        lbl = jnp.full((n, 1), -1.0, jnp.float32)
    packed = jnp.concatenate(
        [kp, lbl, jnp.zeros((n, PACK_W - 4), jnp.float32)], axis=1)
    if n_pad != n:
        packed = jnp.pad(packed, ((0, n_pad - n), (0, 0)), constant_values=-1.0)

    # Weights stored transposed so the kernel computes x @ W (== PyTorch x @ W^T).
    w1 = jnp.zeros((PACK_W, h), jnp.float32).at[:3].set(
        params["w1"].astype(jnp.float32))                     # [8, H], rows 3..7 zero
    b1 = params["b1"].astype(jnp.float32)                     # [1, H]
    gamma = params["gamma"].astype(jnp.float32)               # [1, H]
    beta = params["beta"].astype(jnp.float32)                 # [1, H]
    w2 = params["w2"].astype(jnp.bfloat16)                    # [H, H] bf16 MXU operand
    b2 = params["b2"].astype(jnp.float32)                     # [1, H]

    row_in = pl.BlockSpec((tile, PACK_W), lambda i: (i, 0))
    row_out = pl.BlockSpec((tile, h), lambda i: (i, 0))

    def resident(shape):
        # Constant block index -> buffer stays VMEM-resident, no per-step re-DMA.
        return pl.BlockSpec(shape, lambda i: (0, 0))

    weight_specs = [resident((PACK_W, h)), resident((1, h)), resident((1, h)),
                    resident((1, h)), resident((h, h)), resident((1, h))]

    out_item = jnp.dtype(out_dtype).itemsize
    flops = (2 * n_pad * h * (PACK_W + h + (NUM_SYM_POINTS if has_sym else 0))
             + 10 * n_pad * h)
    bytes_accessed = (n_pad * PACK_W * 4 + n_pad * h * out_item
                      + (PACK_W + 4) * h * 4 + h * h * 2
                      + (NUM_SYM_POINTS * h * 2 if has_sym else 0))
    cost = pl.CostEstimate(flops=flops, transcendentals=n_pad,
                           bytes_accessed=bytes_accessed)
    cparams = pltpu.CompilerParams(dimension_semantics=("parallel",),
                                   vmem_limit_bytes=VMEM_LIMIT_BYTES)

    if has_sym:
        table = params["sym_table"].astype(jnp.bfloat16)      # [10, H]
        out = pl.pallas_call(
            _kernel_with_sym,
            out_shape=jax.ShapeDtypeStruct((n_pad, h), out_dtype),
            grid=(n_steps,),
            in_specs=[row_in] + weight_specs + [resident((NUM_SYM_POINTS, h))],
            out_specs=row_out,
            compiler_params=cparams,
            cost_estimate=cost,
        )(packed, w1, b1, gamma, beta, w2, b2, table)
    else:
        out = pl.pallas_call(
            _kernel_no_sym,
            out_shape=jax.ShapeDtypeStruct((n_pad, h), out_dtype),
            grid=(n_steps,),
            in_specs=[row_in] + weight_specs,
            out_specs=row_out,
            compiler_params=cparams,
            cost_estimate=cost,
        )(packed, w1, b1, gamma, beta, w2, b2)

    return out[:n] if n_pad != n else out


def init_params(key, hidden_dim=HIDDEN_DIM):
    ks = jax.random.split(key, 4)
    # Stored already transposed so kernel computes x @ W (matches PyTorch x @ W^T).
    w1 = jax.random.normal(ks[0], (3, hidden_dim), jnp.float32) * 0.1
    b1 = jax.random.normal(ks[1], (1, hidden_dim), jnp.float32) * 0.01
    w2 = jax.random.normal(ks[2], (hidden_dim, hidden_dim), jnp.float32) * 0.05
    b2 = jnp.zeros((1, hidden_dim), jnp.float32)
    gamma = jnp.ones((1, hidden_dim), jnp.float32)
    beta = jnp.zeros((1, hidden_dim), jnp.float32)
    sym_table = jax.random.normal(ks[3], (NUM_SYM_POINTS, hidden_dim), jnp.float32) * 0.1
    return dict(w1=w1, b1=b1, w2=w2, b2=b2, gamma=gamma, beta=beta,
                sym_table=sym_table)


def _ln_relu(k_points, p):
    h = k_points @ p["w1"] + p["b1"]
    mean = h.mean(-1, keepdims=True)
    var = ((h - mean) ** 2).mean(-1, keepdims=True)
    hn = (h - mean) / jnp.sqrt(var + LN_EPS) * p["gamma"] + p["beta"]
    return jnp.maximum(hn, 0.0)


def _reference_f32(k_points, labels, p):
    hr = _ln_relu(k_points, p)
    y = hr @ p["w2"] + p["b2"]
    if labels is not None and labels.size > 0:
        y = y + p["sym_table"][labels]
    return y


def _reference_bf16_matched(k_points, labels, p):
    # Mirrors the kernel's bf16 MXU operands for Linear2 / embedding (f32 accumulation).
    hr = _ln_relu(k_points, p)
    hr_b = hr.astype(jnp.bfloat16).astype(jnp.float32)
    w2_b = p["w2"].astype(jnp.bfloat16).astype(jnp.float32)
    y = hr_b @ w2_b + p["b2"]
    if labels is not None and labels.size > 0:
        tbl_b = p["sym_table"].astype(jnp.bfloat16).astype(jnp.float32)
        y = y + tbl_b[labels]
    return y


if __name__ == "__main__":
    key = jax.random.PRNGKey(0)
    k_param, k_kpts, k_lbl = jax.random.split(key, 3)

    N = 16
    params = init_params(k_param)
    k_points = jax.random.normal(k_kpts, (N, 3), jnp.float32)
    symmetry_labels = jax.random.randint(k_lbl, (N,), 0, NUM_SYM_POINTS, jnp.int32)

    out = jax.block_until_ready(
        brillouin_zone_encoder(k_points, symmetry_labels, params))
    assert out.shape == (N, HIDDEN_DIM) and out.dtype == jnp.float32

    # Check vs. a reference mirroring the kernel's bf16 Linear2/embedding operands.
    ref_match = _reference_bf16_matched(k_points, symmetry_labels, params)
    assert jnp.allclose(out, ref_match, atol=1e-2, rtol=1e-2), \
        "mismatch vs bf16-matched reference"

    # Looser check vs. the pure-f32 reference (covers bf16 quantization error).
    ref_f32 = _reference_f32(k_points, symmetry_labels, params)
    assert jnp.allclose(out, ref_f32, atol=3e-2, rtol=3e-2), \
        "mismatch vs f32 reference"

    # No-symmetry-labels variant (skips the table DMA and one-hot matmul).
    out_nosym = jax.block_until_ready(brillouin_zone_encoder(k_points, None, params))
    ref_nosym = _reference_bf16_matched(k_points, None, params)
    assert jnp.allclose(out_nosym, ref_nosym, atol=1e-2, rtol=1e-2), \
        "mismatch (no-sym variant)"

    # Multi-tile gridded/padded path (N not a multiple of the tile, grid >= 2).
    N2 = 300
    k2 = jax.random.normal(jax.random.PRNGKey(1), (N2, 3), jnp.float32)
    l2 = jax.random.randint(jax.random.PRNGKey(2), (N2,), 0, NUM_SYM_POINTS, jnp.int32)
    out2 = jax.block_until_ready(brillouin_zone_encoder(k2, l2, params))
    ref2 = _reference_bf16_matched(k2, l2, params)
    assert out2.shape == (N2, HIDDEN_DIM)
    assert jnp.allclose(out2, ref2, atol=1e-2, rtol=1e-2), "mismatch (tiled path)"

    # bf16 output path (halves the dominant HBM write stream).
    out_bf = jax.block_until_ready(
        brillouin_zone_encoder(k_points, symmetry_labels, params,
                               out_dtype=jnp.bfloat16))
    assert out_bf.dtype == jnp.bfloat16
    assert jnp.allclose(out_bf.astype(jnp.float32), ref_match,
                        atol=4e-2, rtol=4e-2), "mismatch (bf16 output path)"

    print("KERNEL_OK")
</pallas_src>

<mosaic_0001>
module attributes {stable_mosaic.version = 11 : i64} {
  func.func @_kernel_with_sym(%arg0: i32, %arg1: memref<16x8xf32, #tpu.memory_space<vmem>>, %arg2: memref<8x128xf32, #tpu.memory_space<vmem>>, %arg3: memref<1x128xf32, #tpu.memory_space<vmem>>, %arg4: memref<1x128xf32, #tpu.memory_space<vmem>>, %arg5: memref<1x128xf32, #tpu.memory_space<vmem>>, %arg6: memref<128x128xbf16, #tpu.memory_space<vmem>>, %arg7: memref<1x128xf32, #tpu.memory_space<vmem>>, %arg8: memref<10x128xbf16, #tpu.memory_space<vmem>>, %arg9: memref<16x128xf32, #tpu.memory_space<vmem>>) attributes {dimension_semantics = [#tpu.dimension_semantics<parallel>], iteration_bounds = array<i64: 1>, scalar_prefetch = 0 : i64, scratch_operands = 0 : i64, tpu.core_type = #tpu.core_type<tc>, window_params = [{transform_indices = @transform_0, window_bounds = array<i64: 16, 8>}, {pipeline_mode = #tpu.pipeline_mode<synchronous>, transform_indices = @transform_1, window_bounds = array<i64: 8, 128>}, {pipeline_mode = #tpu.pipeline_mode<synchronous>, transform_indices = @transform_2, window_bounds = array<i64: 1, 128>}, {pipeline_mode = #tpu.pipeline_mode<synchronous>, transform_indices = @transform_3, window_bounds = array<i64: 1, 128>}, {pipeline_mode = #tpu.pipeline_mode<synchronous>, transform_indices = @transform_4, window_bounds = array<i64: 1, 128>}, {pipeline_mode = #tpu.pipeline_mode<synchronous>, transform_indices = @transform_5, window_bounds = array<i64: 128, 128>}, {pipeline_mode = #tpu.pipeline_mode<synchronous>, transform_indices = @transform_6, window_bounds = array<i64: 1, 128>}, {pipeline_mode = #tpu.pipeline_mode<synchronous>, transform_indices = @transform_7, window_bounds = array<i64: 10, 128>}, {transform_indices = @transform_8, window_bounds = array<i64: 16, 128>}]} {
    %c0 = arith.constant 0 : index
    %c0_0 = arith.constant 0 : index
    %0 = vector.load %arg1[%c0, %c0_0] : memref<16x8xf32, #tpu.memory_space<vmem>>, vector<16x8xf32>
    %c0_1 = arith.constant 0 : index
    %c0_2 = arith.constant 0 : index
    %1 = vector.load %arg2[%c0_1, %c0_2] : memref<8x128xf32, #tpu.memory_space<vmem>>, vector<8x128xf32>
    %cst = arith.constant dense<0.000000e+00> : vector<16x128xf32>
    %2 = tpu.matmul %0, %1, %cst {dimension_numbers = #tpu.dot_dimension_numbers<[1], [0], [0], [1], [0, 0, 1, 1], [], []>} : vector<16x8xf32>, vector<8x128xf32>, vector<16x128xf32> -> vector<16x128xf32>
    %c0_3 = arith.constant 0 : index
    %c0_4 = arith.constant 0 : index
    %3 = vector.load %arg3[%c0_3, %c0_4] : memref<1x128xf32, #tpu.memory_space<vmem>>, vector<1x128xf32>
    %4 = vector.broadcast %3 : vector<1x128xf32> to vector<16x128xf32>
    %5 = arith.addf %2, %4 : vector<16x128xf32>
    %cst_5 = arith.constant dense<0.000000e+00> : vector<16xf32>
    %6 = vector.multi_reduction <add>, %5, %cst_5 [1] : vector<16x128xf32> to vector<16xf32>
    %7 = vector.shape_cast %6 : vector<16xf32> to vector<16x1xf32>
    %cst_6 = arith.constant 1.280000e+02 : f32
    %8 = vector.broadcast %cst_6 : f32 to vector<16x1xf32>
    %9 = arith.divf %7, %8 : vector<16x1xf32>
    %10 = vector.broadcast %9 : vector<16x1xf32> to vector<16x128xf32>
    %11 = arith.subf %5, %10 : vector<16x128xf32>
    %12 = arith.mulf %11, %11 : vector<16x128xf32>
    %cst_7 = arith.constant dense<0.000000e+00> : vector<16xf32>
    %13 = vector.multi_reduction <add>, %12, %cst_7 [1] : vector<16x128xf32> to vector<16xf32>
    %14 = vector.shape_cast %13 : vector<16xf32> to vector<16x1xf32>
    %cst_8 = arith.constant 1.280000e+02 : f32
    %15 = vector.broadcast %cst_8 : f32 to vector<16x1xf32>
    %16 = arith.divf %14, %15 : vector<16x1xf32>
    %cst_9 = arith.constant 9.99999974E-6 : f32
    %17 = vector.broadcast %cst_9 : f32 to vector<16x1xf32>
    %18 = arith.addf %16, %17 : vector<16x1xf32>
    %19 = math.rsqrt %18 : vector<16x1xf32>
    %c0_10 = arith.constant 0 : index
    %c0_11 = arith.constant 0 : index
    %20 = vector.load %arg4[%c0_10, %c0_11] : memref<1x128xf32, #tpu.memory_space<vmem>>, vector<1x128xf32>
    %21 = vector.broadcast %19 : vector<16x1xf32> to vector<16x128xf32>
    %22 = vector.broadcast %20 : vector<1x128xf32> to vector<16x128xf32>
    %23 = arith.mulf %21, %22 : vector<16x128xf32>
    %24 = arith.mulf %11, %23 : vector<16x128xf32>
    %c0_12 = arith.constant 0 : index
    %c0_13 = arith.constant 0 : index
    %25 = vector.load %arg5[%c0_12, %c0_13] : memref<1x128xf32, #tpu.memory_space<vmem>>, vector<1x128xf32>
    %26 = vector.broadcast %25 : vector<1x128xf32> to vector<16x128xf32>
    %27 = arith.addf %24, %26 : vector<16x128xf32>
    %cst_14 = arith.constant 0.000000e+00 : f32
    %28 = vector.broadcast %cst_14 : f32 to vector<16x128xf32>
    %29 = arith.maximumf %27, %28 : vector<16x128xf32>
    %30 = arith.truncf %29 : vector<16x128xf32> to vector<16x128xbf16>
    %c0_15 = arith.constant 0 : index
    %c0_16 = arith.constant 0 : index
    %31 = vector.load %arg6[%c0_15, %c0_16] : memref<128x128xbf16, #tpu.memory_space<vmem>>, vector<128x128xbf16>
    %cst_17 = arith.constant dense<0.000000e+00> : vector<16x128xf32>
    %32 = tpu.matmul %30, %31, %cst_17 {dimension_numbers = #tpu.dot_dimension_numbers<[1], [0], [0], [1], [0, 0, 1, 1], [], []>} : vector<16x128xbf16>, vector<128x128xbf16>, vector<16x128xf32> -> vector<16x128xf32>
    %c0_18 = arith.constant 0 : index
    %c0_19 = arith.constant 0 : index
    %33 = vector.load %arg7[%c0_18, %c0_19] : memref<1x128xf32, #tpu.memory_space<vmem>>, vector<1x128xf32>
    %34 = vector.broadcast %33 : vector<1x128xf32> to vector<16x128xf32>
    %35 = arith.addf %32, %34 : vector<16x128xf32>
    %36 = vector.extract_strided_slice %0 {offsets = [0, 3], sizes = [16, 1], strides = [1, 1]} : vector<16x8xf32> to vector<16x1xf32>
    %37 = arith.fptosi %36 : vector<16x1xf32> to vector<16x1xi32>
    %38 = tpu.iota {dimensions = array<i32: 1>} : vector<16x10xi32>
    %39 = vector.broadcast %37 : vector<16x1xi32> to vector<16x10xi32>
    %40 = arith.cmpi eq, %39, %38 : vector<16x10xi32>
    %41 = arith.extui %40 : vector<16x10xi1> to vector<16x10xi32>
    %42 = arith.sitofp %41 : vector<16x10xi32> to vector<16x10xf32>
    %43 = arith.truncf %42 : vector<16x10xf32> to vector<16x10xbf16>
    %c0_20 = arith.constant 0 : index
    %c0_21 = arith.constant 0 : index
    %44 = vector.load %arg8[%c0_20, %c0_21] : memref<10x128xbf16, #tpu.memory_space<vmem>>, vector<10x128xbf16>
    %cst_22 = arith.constant dense<0.000000e+00> : vector<16x128xf32>
    %45 = tpu.matmul %43, %44, %cst_22 {dimension_numbers = #tpu.dot_dimension_numbers<[1], [0], [0], [1], [0, 0, 1, 1], [], []>} : vector<16x10xbf16>, vector<10x128xbf16>, vector<16x128xf32> -> vector<16x128xf32>
    %46 = arith.addf %35, %45 : vector<16x128xf32>
    %c0_23 = arith.constant 0 : index
    %c0_24 = arith.constant 0 : index
    %47 = vector.load %arg9[%c0_23, %c0_24] : memref<16x128xf32, #tpu.memory_space<vmem>>, vector<16x128xf32>
    tpu.vector_store %arg9[%c0_23, %c0_24], %46 {strides = array<i32>} : memref<16x128xf32, #tpu.memory_space<vmem>>, vector<16x128xf32>,
    return
  }
  func.func @transform_0(%arg0: i32) -> (i32, i32) {
    %c0_i32 = arith.constant 0 : i32
    %c0_i32_0 = arith.constant 0 : i32
    return %arg0, %c0_i32 : i32, i32
  }
  func.func @transform_1(%arg0: i32) -> (i32, i32) {
    %c0_i32 = arith.constant 0 : i32
    %c0_i32_0 = arith.constant 0 : i32
    %c0_i32_1 = arith.constant 0 : i32
    return %c0_i32, %c0_i32_0 : i32, i32
  }
  func.func @transform_2(%arg0: i32) -> (i32, i32) {
    %c0_i32 = arith.constant 0 : i32
    %c0_i32_0 = arith.constant 0 : i32
    %c0_i32_1 = arith.constant 0 : i32
    return %c0_i32, %c0_i32_0 : i32, i32
  }
  func.func @transform_3(%arg0: i32) -> (i32, i32) {
    %c0_i32 = arith.constant 0 : i32
    %c0_i32_0 = arith.constant 0 : i32
    %c0_i32_1 = arith.constant 0 : i32
    return %c0_i32, %c0_i32_0 : i32, i32
  }
  func.func @transform_4(%arg0: i32) -> (i32, i32) {
    %c0_i32 = arith.constant 0 : i32
    %c0_i32_0 = arith.constant 0 : i32
    %c0_i32_1 = arith.constant 0 : i32
    return %c0_i32, %c0_i32_0 : i32, i32
  }
  func.func @transform_5(%arg0: i32) -> (i32, i32) {
    %c0_i32 = arith.constant 0 : i32
    %c0_i32_0 = arith.constant 0 : i32
    %c0_i32_1 = arith.constant 0 : i32
    return %c0_i32, %c0_i32_0 : i32, i32
  }
  func.func @transform_6(%arg0: i32) -> (i32, i32) {
    %c0_i32 = arith.constant 0 : i32
    %c0_i32_0 = arith.constant 0 : i32
    %c0_i32_1 = arith.constant 0 : i32
    return %c0_i32, %c0_i32_0 : i32, i32
  }
  func.func @transform_7(%arg0: i32) -> (i32, i32) {
    %c0_i32 = arith.constant 0 : i32
    %c0_i32_0 = arith.constant 0 : i32
    %c0_i32_1 = arith.constant 0 : i32
    return %c0_i32, %c0_i32_0 : i32, i32
  }
  func.func @transform_8(%arg0: i32) -> (i32, i32) {
    %c0_i32 = arith.constant 0 : i32
    %c0_i32_0 = arith.constant 0 : i32
    return %arg0, %c0_i32 : i32, i32
  }
}

</mosaic_0001>

<llo_original>
// kernel: tpu_custom_call.1
$region0: #{tpu_custom_call.1}
  #allocation0 [shape = 'u32[]', space=smem, size = 0x4, offset = 0x4, fixed_abs, tag = 'smem constant byte address 0x4 - core index']
  #allocation1 [shape = 'u32[144,128]{1,0:T(1,128)}', space=vmem, size = 0x12000, scoped, tag = 'internal scratch']
  %s0 = inlined_call_operand.vmem [shape: f32[16,8], index: 0, kind: input, shape index: {}]
  %s1 = inlined_call_operand.vmem [shape: f32[8,128], index: 1, kind: input, shape index: {}]
  %s2 = inlined_call_operand.vmem [shape: f32[1,128], index: 2, kind: input, shape index: {}]
  %s3 = inlined_call_operand.vmem [shape: f32[1,128], index: 3, kind: input, shape index: {}]
  %s4 = inlined_call_operand.vmem [shape: f32[1,128], index: 4, kind: input, shape index: {}]
  %s5 = inlined_call_operand.hbm [shape: bf16[128,128], index: 5, kind: input, shape index: {}]
  %s6 = inlined_call_operand.vmem [shape: f32[1,128], index: 6, kind: input, shape index: {}]
  %s7 = inlined_call_operand.vmem [shape: bf16[10,128], index: 7, kind: input, shape index: {}]
  %s8 = inlined_call_operand.hbm [shape: f32[16,128], index: 8, kind: output, shape index: {}]
  %s9 = sld [smem:[#allocation0]]
  $region46: #{tpu_custom_call.1} parent=0
    _
  %s11 = ssub.s32 1, %s9
  %s12 = scalar_select 0, %s11, %s9
  $region1: #{tpu_custom_call.1} parent=0
    #allocation2 [shape = 'u8[32768]{0}', space=vmem, size = 0x8000, scoped, tag = 'input window, operand 5, single buffered']
    #allocation3 [shape = 's32[1]{0}', space=sflag, size = 0x4, scoped, tag = 'scoped memory for tpu_custom_call.1']
    #allocation4 [shape = 's32[1]{0}', space=sflag, size = 0x4, scoped, tag = 'scoped memory for tpu_custom_call.1']
    #allocation5 [shape = 'u8[8192]{0}', space=vmem, size = 0x2000, scoped, tag = 'output window, operand 0, single buffered']
    %13 = vsyncpa [#allocation3], 0
    %14 = vsyncpa [#allocation4], 0
    // Predicated region
    $region2: #{tpu_custom_call.1} parent=1 // pred_check
      _
    $region3: #{tpu_custom_call.1} parent=1 // pred_check_branch
      %16 = sbr.rel (0) target = $region5
    $region4: #{tpu_custom_call.1} parent=1 // pred_region
      _
    $region5: #{tpu_custom_call.1} parent=1 // pred_fallthru
      _
    // Predicated region
    $region6: #{tpu_custom_call.1} parent=1 // pred_check
      _
    $region7: #{tpu_custom_call.1} parent=1 // pred_check_branch
      %18 = sbr.rel (0) target = $region9
    $region8: #{tpu_custom_call.1} parent=1 // pred_region
      _
    $region9: #{tpu_custom_call.1} parent=1 // pred_fallthru
      _
    // Predicated region
    $region10: #{tpu_custom_call.1} parent=1 // pred_check
      _
    $region11: #{tpu_custom_call.1} parent=1 // pred_check_branch
      %20 = sbr.rel (0) target = $region13
    $region12: #{tpu_custom_call.1} parent=1 // pred_region
      _
    $region13: #{tpu_custom_call.1} parent=1 // pred_fallthru
      _
    // Predicated region
    $region14: #{tpu_custom_call.1} parent=1 // pred_check
      _
    $region15: #{tpu_custom_call.1} parent=1 // pred_check_branch
      %22 = sbr.rel (0) target = $region17
    $region16: #{tpu_custom_call.1} parent=1 // pred_region
      _
    $region17: #{tpu_custom_call.1} parent=1 // pred_fallthru
      _
    // Predicated region
    $region18: #{tpu_custom_call.1} parent=1 // pred_check
      _
    $region19: #{tpu_custom_call.1} parent=1 // pred_check_branch
      %24 = sbr.rel (0) target = $region21
    $region20: #{tpu_custom_call.1} parent=1 // pred_region
      _
    $region21: #{tpu_custom_call.1} parent=1 // pred_fallthru
      _
    // Predicated region
    $region22: #{tpu_custom_call.1} parent=1 // pred_check
      _
    $region23: #{tpu_custom_call.1} parent=1 // pred_check_branch
      %26 = sbr.rel (0) target = $region25
    $region24: #{tpu_custom_call.1} parent=1 // pred_region
      %s28 = ssub.s32 1024, 1024
      %29 = vsyncadd [#allocation3], %s28
      %s30 = sshll.u32 [#allocation2], 4
      %s31 = int_to_ptr.vmem [resolvable:$true] %s30
      %36 = dma.hbm_to_vmem [thread:$0]  %s5, 1024, %s31, [#allocation3], 64, 64, 4
    $region25: #{tpu_custom_call.1} parent=1 // pred_fallthru
      _
    // Predicated region
    $region26: #{tpu_custom_call.1} parent=1 // pred_check
      _
    $region27: #{tpu_custom_call.1} parent=1 // pred_check_branch
      %38 = sbr.rel (0) target = $region29
    $region28: #{tpu_custom_call.1} parent=1 // pred_region
      _
    $region29: #{tpu_custom_call.1} parent=1 // pred_fallthru
      _
    // Predicated region
    $region30: #{tpu_custom_call.1} parent=1 // pred_check
      _
    $region31: #{tpu_custom_call.1} parent=1 // pred_check_branch
      %40 = sbr.rel (0) target = $region33
    $region32: #{tpu_custom_call.1} parent=1 // pred_region
      _
    $region33: #{tpu_custom_call.1} parent=1 // pred_fallthru
      _
    // Predicated region
    $region34: #{tpu_custom_call.1} parent=1 // pred_check
      _
    $region35: #{tpu_custom_call.1} parent=1 // pred_check_branch
      %42 = sbr.rel (0) target = $region37
    $region36: #{tpu_custom_call.1} parent=1 // pred_region
      %43 = dma.done [#allocation3], 1024
    $region37: #{tpu_custom_call.1} parent=1 // pred_fallthru
      _
    %v45 = vld [vmem:[%s0] sm:$0xff]
    %v46 = vld [vmem:[%s0 + $0x8] sm:$0xff]
    %v47 = vld [vmem:[%s1] sm:$0xff]
    %v48 = vld [vmem:[%s2] sm:$0x1]
    %v50 = vlaneseq
    %v51 = vshrl.u32 %v50, 7
    %v52 = vsub.s32 0, %v51
    %v53 = vrot.slane %v48, %v52
    %vm55 = vcmask 64512
    %v57 = vsel %vm55, %v45, 0
    %v60 = vsel %vm55, %v46, 0
    %62 = vmatprep.subr.mxu0 0.0
    %63 = vmatpush1.msra.mxu0 %v47
    %64 = vmatprep.subr.mxu0 0.0
    %65 = vmatpush1.msra.mxu0 0.0
    %66 = vmatprep.subr.mxu0 0.0
    %67 = vmatpush1.msra.mxu0 0.0
    %68 = vmatprep.subr.mxu0 0.0
    %69 = vmatpush1.msra.mxu0 0.0
    %70 = vmatprep.subr.mxu0 0.0
    %71 = vmatpush1.msra.mxu0 0.0
    %72 = vmatprep.subr.mxu0 0.0
    %73 = vmatpush1.msra.mxu0 0.0
    %74 = vmatprep.subr.mxu0 0.0
    %75 = vmatpush1.msra.mxu0 0.0
    %76 = vmatprep.subr.mxu0 0.0
    %77 = vmatpush1.msra.mxu0 0.0
    %78 = vmatprep.subr.mxu0 0.0
    %79 = vmatpush1.msra.mxu0 0.0
    %80 = vmatprep.subr.mxu0 0.0
    %81 = vmatpush1.msra.mxu0 0.0
    %82 = vmatprep.subr.mxu0 0.0
    %83 = vmatpush1.msra.mxu0 0.0
    %84 = vmatprep.subr.mxu0 0.0
    %85 = vmatpush1.msra.mxu0 0.0
    %86 = vmatprep.subr.mxu0 0.0
    %87 = vmatpush1.msra.mxu0 0.0
    %88 = vmatprep.subr.mxu0 0.0
    %89 = vmatpush1.msra.mxu0 0.0
    %90 = vmatprep.subr.mxu0 0.0
    %91 = vmatpush1.msra.mxu0 0.0
    %92 = vmatprep.subr.mxu0 0.0
    %93 = vmatpush1.msra.mxu0 0.0
    %94 = vmatprep.subr.mxu0 0.0
    %95 = vmatpush1.msra.mxu0 0.0
    %96 = vmatprep.subr.mxu0 0.0
    %97 = vmatpush1.msra.mxu0 0.0
    %98 = vmatprep.subr.mxu0 0.0
    %99 = vmatpush1.msra.mxu0 0.0
    %100 = vmatprep.subr.mxu0 0.0
    %101 = vmatpush1.msra.mxu0 0.0
    %102 = vmatprep.subr.mxu0 0.0
    %103 = vmatpush1.msra.mxu0 0.0
    %104 = vmatprep.subr.mxu0 0.0
    %105 = vmatpush1.msra.mxu0 0.0
    %106 = vmatprep.subr.mxu0 0.0
    %107 = vmatpush1.msra.mxu0 0.0
    %108 = vmatprep.subr.mxu0 0.0
    %109 = vmatpush1.msra.mxu0 0.0
    %110 = vmatprep.subr.mxu0 0.0
    %111 = vmatpush1.msra.mxu0 0.0
    %112 = vmatprep.subr.mxu0 0.0
    %113 = vmatpush1.msra.mxu0 0.0
    %114 = vmatprep.subr.mxu0 0.0
    %115 = vmatpush1.msra.mxu0 0.0
    %116 = vmatprep.subr.mxu0 0.0
    %117 = vmatpush1.msra.mxu0 0.0
    %118 = vmatprep.subr.mxu0 0.0
    %119 = vmatpush1.msra.mxu0 0.0
    %120 = vmatprep.subr.mxu0 0.0
    %121 = vmatpush1.msra.mxu0 0.0
    %122 = vmatprep.subr.mxu0 0.0
    %123 = vmatpush1.msra.mxu0 0.0
    %124 = vmatprep.subr.mxu0 0.0
    %125 = vmatpush1.msra.mxu0 0.0
    %126 = vmatprep.mubr.f32.mxu0 0.0
    %127 = vmatmul.mubr.f32.gmra.mrb[0].mxu0 %v57
    %v128 = vpop.f32.mrb[0].mxu0
    %v129 = vadd.f32 %v53, %v128
    %v130 = vpop.f32.mrb[0].mxu0
    %131 = vmatprep.mubr.f32.mxu0 0.0
    %132 = vmatmul.mubr.f32.gmra.mrb[0].mxu0 %v60
    %v133 = vpop.f32.mrb[0].mxu0
    %v134 = vadd.f32 %v53, %v133
    %v135 = vpop.f32.mrb[0].mxu0
    %136 = vdwg.mxu0
    %137 = vadd.xlane.f32.xlu0 %v129
    %v138 = vpop.xlane.xlu0 %137
    %139 = vadd.xlane.f32.xlu0 %v134
    %v140 = vpop.xlane.xlu0 %139
    %v141 = vrcp.pop 128.0
    %v142 = vmul.f32 %v138, %v141
    %v143 = vmul.f32 %v140, %v141
    %v144 = vsub.f32 %v129, %v142
    %v145 = vsub.f32 %v134, %v143
    %v146 = vmul.f32 %v144, %v144
    %v147 = vmul.f32 %v145, %v145
    %148 = vadd.xlane.f32.xlu0 %v146
    %v149 = vpop.xlane.xlu0 %148
    %150 = vadd.xlane.f32.xlu0 %v147
    %v151 = vpop.xlane.xlu0 %150
    %v152 = vmul.f32 %v149, %v141
    %v153 = vmul.f32 %v151, %v141
    %v154 = vadd.f32 %v152, 1e-05
    %v155 = vadd.f32 %v153, 1e-05
    %v156 = vrsqrt.pop %v154
    %v157 = vrsqrt.pop %v155
    %v158 = vld [vmem:[%s3] sm:$0x1]
    %v160 = vlaneseq
    %v161 = vshrl.u32 %v160, 7
    %v162 = vsub.s32 0, %v161
    %v163 = vrot.slane %v158, %v162
    %v165 = vmul.f32 %v156, %v163
    %v166 = vmul.f32 %v157, %v163
    %v167 = vmul.f32 %v144, %v165
    %v168 = vmul.f32 %v145, %v166
    %v169 = vld [vmem:[%s4] sm:$0x1]
    %v171 = vlaneseq
    %v172 = vshrl.u32 %v171, 7
    %v173 = vsub.s32 0, %v172
    %v174 = vrot.slane %v169, %v173
    %v176 = vadd.f32 %v167, %v174
    %v177 = vadd.f32 %v168, %v174
    %v178 = vmax.f32 %v176, 0.0
    %v179 = vmax.f32 %v177, 0.0
    %v180 = vpack.c.bf16 %v179, %v178
    %v181 = vld [vmem:[#allocation2] sm:$0xf]
    %v182 = vld [vmem:[#allocation2 + $0x4] sm:$0xf]
    %v183 = vld [vmem:[#allocation2 + $0x8] sm:$0xf]
    %v184 = vld [vmem:[#allocation2 + $0xc] sm:$0xf]
    %v185 = vld [vmem:[#allocation2 + $0x10] sm:$0xf]
    %v186 = vld [vmem:[#allocation2 + $0x14] sm:$0xf]
    %v187 = vld [vmem:[#allocation2 + $0x18] sm:$0xf]
    %v188 = vld [vmem:[#allocation2 + $0x1c] sm:$0xf]
    %v189 = vld [vmem:[#allocation2 + $0x20] sm:$0xf]
    %v190 = vld [vmem:[#allocation2 + $0x24] sm:$0xf]
    %v191 = vld [vmem:[#allocation2 + $0x28] sm:$0xf]
    %v192 = vld [vmem:[#allocation2 + $0x2c] sm:$0xf]
    %v193 = vld [vmem:[#allocation2 + $0x30] sm:$0xf]
    %v194 = vld [vmem:[#allocation2 + $0x34] sm:$0xf]
    %v195 = vld [vmem:[#allocation2 + $0x38] sm:$0xf]
    %v196 = vld [vmem:[#allocation2 + $0x3c] sm:$0xf]
    %v197 = vld [vmem:[%s6] sm:$0x1]
    %v199 = vlaneseq
    %v200 = vshrl.u32 %v199, 7
    %v201 = vsub.s32 0, %v200
    %v202 = vrot.slane %v197, %v201
    %v220 = vunpack.c.l.b16 %v181
    %v221 = vunpack.c.l.b16 %v182
    %v222 = vunpack.c.l.b16 %v183
    %v223 = vunpack.c.l.b16 %v184
    %v224 = vunpack.c.l.b16 %v185
    %v225 = vunpack.c.l.b16 %v186
    %v226 = vunpack.c.l.b16 %v187
    %v227 = vunpack.c.l.b16 %v188
    %v228 = vunpack.c.l.b16 %v189
    %v229 = vunpack.c.l.b16 %v190
    %v230 = vunpack.c.l.b16 %v191
    %v231 = vunpack.c.l.b16 %v192
    %v232 = vunpack.c.l.b16 %v193
    %v233 = vunpack.c.l.b16 %v194
    %v234 = vunpack.c.l.b16 %v195
    %v235 = vunpack.c.l.b16 %v196
    %v236 = vpack.c.b16 %v221, %v220
    %v237 = vpack.c.b16 %v223, %v222
    %v238 = vpack.c.b16 %v225, %v224
    %v239 = vpack.c.b16 %v227, %v226
    %v240 = vpack.c.b16 %v229, %v228
    %v241 = vpack.c.b16 %v231, %v230
    %v242 = vpack.c.b16 %v233, %v232
    %v243 = vpack.c.b16 %v235, %v234
    %252 = vmatprep.subr.bf16.mxu0 0
    %253 = vmatpush1.bf16.msra.mxu0 %v236
    %254 = vmatprep.subr.bf16.mxu0 0
    %255 = vmatpush1.bf16.msra.mxu0 %v237
    %256 = vmatprep.subr.bf16.mxu0 0
    %257 = vmatpush1.bf16.msra.mxu0 %v238
    %258 = vmatprep.subr.bf16.mxu0 0
    %259 = vmatpush1.bf16.msra.mxu0 %v239
    %260 = vmatprep.subr.bf16.mxu0 0
    %261 = vmatpush1.bf16.msra.mxu0 %v240
    %262 = vmatprep.subr.bf16.mxu0 0
    %263 = vmatpush1.bf16.msra.mxu0 %v241
    %264 = vmatprep.subr.bf16.mxu0 0
    %265 = vmatpush1.bf16.msra.mxu0 %v242
    %266 = vmatprep.subr.bf16.mxu0 0
    %267 = vmatpush1.bf16.msra.mxu0 %v243
    %268 = vmatprep.subr.bf16.mxu0 0
    %269 = vmatpush1.bf16.msra.mxu0 0
    %270 = vmatprep.subr.bf16.mxu0 0
    %271 = vmatpush1.bf16.msra.mxu0 0
    %272 = vmatprep.subr.bf16.mxu0 0
    %273 = vmatpush1.bf16.msra.mxu0 0
    %274 = vmatprep.subr.bf16.mxu0 0
    %275 = vmatpush1.bf16.msra.mxu0 0
    %276 = vmatprep.subr.bf16.mxu0 0
    %277 = vmatpush1.bf16.msra.mxu0 0
    %278 = vmatprep.subr.bf16.mxu0 0
    %279 = vmatpush1.bf16.msra.mxu0 0
    %280 = vmatprep.subr.bf16.mxu0 0
    %281 = vmatpush1.bf16.msra.mxu0 0
    %282 = vmatprep.subr.bf16.mxu0 0
    %283 = vmatpush1.bf16.msra.mxu0 0
    %284 = vmatprep.mubr.bf16.mxu0 0
    %285 = vmatmul.mubr.bf16.gmra.mrb[0].mxu0 %v180
    %v286 = vpop.f32.mrb[0].mxu0
    %v287 = vadd.f32 %v202, %v286
    %v288 = vpop.f32.mrb[0].mxu0
    %v289 = vpop.f32.mrb[0].mxu0
    %v290 = vadd.f32 %v202, %v289
    %v291 = vpop.f32.mrb[0].mxu0
    %292 = vdwg.mxu0
    %v293 = vcvt.f32.s32.to.zero.pseudo %v45
    %v294 = vcvt.f32.s32.to.zero.pseudo %v46
    %v295 = vlaneseq
    %v296 = vand.u32 %v295, 127
    %297 = vset.pattern.permute.xlu0 3
    %298 = vperm.xlu0 %297, %v293
    %v299 = vpop.permute.xlu0 %298
    %300 = vset.pattern.permute.xlu0 3
    %301 = vperm.xlu0 %300, %v294
    %v302 = vpop.permute.xlu0 %301
    %vm303 = vcmp.eq.s32.totalorder %v299, %v296
    %vm304 = vcmp.eq.s32.totalorder %v302, %v296
    %v305 = vsel %vm303, 1, 0
    %v306 = vsel %vm304, 1, 0
    %v307 = vcvt.s32.f32 %v305
    %v308 = vcvt.s32.f32 %v306
    %v309 = vpack.c.bf16 %v308, %v307
    %v310 = vld [vmem:[%s7] sm:$0xf]
    %v311 = vld [vmem:[%s7 + $0x4] sm:$0x1]
    %v314 = vunpack.c.l.b16 %v310
    %v315 = vunpack.c.l.b16 %v311
    %v316 = vpack.c.b16 %v315, %v314
    %vm317 = vcmask 80896
    %v319 = vsel %vm317, %v309, 0
    %vm321 = vcmask 1044480
    %v323 = vsel %vm321, %v316, 0
    %325 = vmatprep.subr.bf16.mxu0 0
    %326 = vmatpush1.bf16.msra.mxu0 %v323
    %327 = vmatprep.subr.bf16.mxu0 0
    %328 = vmatpush1.bf16.msra.mxu0 0
    %329 = vmatprep.subr.bf16.mxu0 0
    %330 = vmatpush1.bf16.msra.mxu0 0
    %331 = vmatprep.subr.bf16.mxu0 0
    %332 = vmatpush1.bf16.msra.mxu0 0
    %333 = vmatprep.subr.bf16.mxu0 0
    %334 = vmatpush1.bf16.msra.mxu0 0
    %335 = vmatprep.subr.bf16.mxu0 0
    %336 = vmatpush1.bf16.msra.mxu0 0
    %337 = vmatprep.subr.bf16.mxu0 0
    %338 = vmatpush1.bf16.msra.mxu0 0
    %339 = vmatprep.subr.bf16.mxu0 0
    %340 = vmatpush1.bf16.msra.mxu0 0
    %341 = vmatprep.subr.bf16.mxu0 0
    %342 = vmatpush1.bf16.msra.mxu0 0
    %343 = vmatprep.subr.bf16.mxu0 0
    %344 = vmatpush1.bf16.msra.mxu0 0
    %345 = vmatprep.subr.bf16.mxu0 0
    %346 = vmatpush1.bf16.msra.mxu0 0
    %347 = vmatprep.subr.bf16.mxu0 0
    %348 = vmatpush1.bf16.msra.mxu0 0
    %349 = vmatprep.subr.bf16.mxu0 0
    %350 = vmatpush1.bf16.msra.mxu0 0
    %351 = vmatprep.subr.bf16.mxu0 0
    %352 = vmatpush1.bf16.msra.mxu0 0
    %353 = vmatprep.subr.bf16.mxu0 0
    %354 = vmatpush1.bf16.msra.mxu0 0
    %355 = vmatprep.subr.bf16.mxu0 0
    %356 = vmatpush1.bf16.msra.mxu0 0
    %357 = vmatprep.mubr.bf16.mxu0 0
    %358 = vmatmul.mubr.bf16.gmra.mrb[0].mxu0 %v319
    %v359 = vpop.f32.mrb[0].mxu0
    %v360 = vadd.f32 0.0, %v359
    %v361 = vpop.f32.mrb[0].mxu0
    %v362 = vpop.f32.mrb[0].mxu0
    %v363 = vadd.f32 0.0, %v362
    %v364 = vpop.f32.mrb[0].mxu0
    %365 = vdwg.mxu0
    %v366 = vadd.f32 %v287, %v360
    %v367 = vadd.f32 %v290, %v363
    %368 = vst [vmem:[#allocation5] sm:$0xff] %v366
    %369 = vst [vmem:[#allocation5 + $0x8] sm:$0xff] %v367
    // Predicated region
    $region38: #{tpu_custom_call.1} parent=1 // pred_check
      _
    $region39: #{tpu_custom_call.1} parent=1 // pred_check_branch
      %371 = sbr.rel (0) target = $region41
    $region40: #{tpu_custom_call.1} parent=1 // pred_region
      %s373 = ssub.s32 256, 256
      %374 = vsyncadd [#allocation4], %s373
      %s375 = sshll.u32 [#allocation5], 4
      %s376 = int_to_ptr.vmem [resolvable:$true] %s375
      %381 = dma.vmem_to_hbm [thread:$0]  %s376, 256, %s8, [#allocation4], 128, 128, 8
    $region41: #{tpu_custom_call.1} parent=1 // pred_fallthru
      _
    // Predicated region
    $region42: #{tpu_custom_call.1} parent=1 // pred_check
      _
    $region43: #{tpu_custom_call.1} parent=1 // pred_check_branch
      %383 = sbr.rel (0) target = $region45
    $region44: #{tpu_custom_call.1} parent=1 // pred_region
      %384 = dma.done [#allocation4], 256
    $region45: #{tpu_custom_call.1} parent=1 // pred_fallthru
      _
    %385 = vsyncpa [#allocation3], 1
    %386 = vsyncpa [#allocation4], 1

</llo_original>
